<compile_context>
chip_gen: v7x
topology: tpu7x:2x2x1
jax: 0.10.0
libtpu: 0.0.40
codegen_flags: <defaults>
</compile_context>

<pallas_src>
import jax
import jax.numpy as jnp
from jax.experimental import pallas as pl
from jax.experimental.pallas import tpu as pltpu


def conv_bn_relu_kernel(w_t_ref, p_t_ref, b_ref, o_ref):
    """Fused (im2col-matmul + bias + ReLU), transposed orientation.

    w_t_ref: (Cout, K)          BN-scale-folded conv weights, K = Cin*KH*KW
    p_t_ref: (K, lane_tile)     im2col patches (flattened N*H*W on the lanes)
    b_ref:   (Cout, 1)          folded bias (conv bias + BN), lane-broadcast
    o_ref:   (Cout, lane_tile)  lane-dense output block (unmasked vst)
    """
    acc = jnp.dot(w_t_ref[...], p_t_ref[...],
                  preferred_element_type=jnp.float32)      # (Cout, lane_tile)
    o_ref[...] = jnp.maximum(acc + b_ref[...], 0.0).astype(o_ref.dtype)


def _pick_lane_tile(total_lanes, target=2048):
    """Largest 128-multiple divisor of total_lanes <= target, preferring >= 2
    grid steps so v7x's two TensorCores both get work."""
    divs = [d for d in range(128, total_lanes + 1, 128) if total_lanes % d == 0]
    if not divs:
        return total_lanes                      # full-extent block (always legal)
    pref = [d for d in divs if d <= target and total_lanes // d >= 2]
    if pref:
        return max(pref)
    small = [d for d in divs if d <= target]
    return max(small) if small else min(divs)


def conv_block_forward(x_nchw, w_oihw, conv_bias, gamma, beta,
                       running_mean, running_var, eps=1e-5,
                       lane_tile=None, compute_dtype=jnp.float32):
    N, Cin, H, Wd = x_nchw.shape
    Cout, _, KH, KW = w_oihw.shape
    K = Cin * KH * KW
    HW = H * Wd
    total_lanes = N * HW

    # ----- im2col built directly in (K, N*H*W): no transposes of big arrays ---
    x_pad = jnp.pad(x_nchw, ((0, 0), (0, 0), (1, 1), (1, 1)))   # padding=1
    # Tap order (cin, kh, kw) row-major -> matches w_oihw.reshape(Cout, K).
    taps = [x_pad[:, c, kh:kh + H, kw:kw + Wd]                  # each (N, H, W)
            for c in range(Cin) for kh in range(KH) for kw in range(KW)]
    p_t = jnp.stack(taps, axis=0).reshape(K, total_lanes).astype(compute_dtype)

    # ----- fold inference BatchNorm into conv weights / bias -------------------
    #   BN(conv(x, w) + b) = conv(x, w*scale) + (b - mean)*scale + beta
    scale = gamma / jnp.sqrt(running_var + eps)                 # (Cout,)
    w_t = (w_oihw * scale[:, None, None, None]).reshape(Cout, K)
    w_t = w_t.astype(compute_dtype)                             # (Cout, K)
    bias = ((conv_bias - running_mean) * scale + beta)
    bias = bias.reshape(Cout, 1).astype(jnp.float32)            # (Cout, 1)

    # ----- lane-axis tiling / grid shape ---------------------------------------
    if lane_tile is None:
        lane_tile = _pick_lane_tile(total_lanes)
    assert total_lanes % lane_tile == 0
    num_steps = total_lanes // lane_tile

    # VMEM budget: everything (incl. constant-index weights/bias) is double-
    # buffered by the pipeline.  Clamp to v7x's 64 MiB physical VMEM; at the toy
    # shape this just re-states the 32 MiB default.
    out_dtype = x_nchw.dtype
    in_sz = jnp.dtype(compute_dtype).itemsize
    out_sz = jnp.dtype(out_dtype).itemsize
    need = 2 * (Cout * K * in_sz + Cout * 4
                + K * lane_tile * in_sz
                + Cout * lane_tile * out_sz) + (1 << 20)        # +1 MiB headroom
    vmem_limit = int(min(max(need, 32 << 20), 64 << 20))

    out_t = pl.pallas_call(
        conv_bn_relu_kernel,
        out_shape=jax.ShapeDtypeStruct((Cout, total_lanes), out_dtype),
        grid_spec=pltpu.PrefetchScalarGridSpec(
            num_scalar_prefetch=0,
            grid=(num_steps,),
            in_specs=[
                pl.BlockSpec((Cout, K), lambda i: (0, 0)),          # weights (resident)
                pl.BlockSpec((K, lane_tile), lambda i: (0, i)),     # patch lane tile
                pl.BlockSpec((Cout, 1), lambda i: (0, 0)),          # bias (resident)
            ],
            out_specs=pl.BlockSpec((Cout, lane_tile), lambda i: (0, i)),  # lane-dense
        ),
        compiler_params=pltpu.CompilerParams(
            dimension_semantics=("parallel",),                      # shards across TCs on v7x
            vmem_limit_bytes=vmem_limit),
    )(w_t, p_t, bias)

    # (Cout, N*H*W) is channel-major flattened -> back to NCHW.
    return jnp.transpose(out_t.reshape(Cout, N, H, Wd), (1, 0, 2, 3))


def reference_forward(x, w, conv_bias, gamma, beta, running_mean, running_var,
                      eps=1e-5):
    y = jax.lax.conv_general_dilated(
        x, w, window_strides=(1, 1), padding="SAME",
        dimension_numbers=("NCHW", "OIHW", "NCHW"))
    y = y + conv_bias.reshape(1, -1, 1, 1)
    y = (y - running_mean.reshape(1, -1, 1, 1)) / jnp.sqrt(
        running_var.reshape(1, -1, 1, 1) + eps)
    y = gamma.reshape(1, -1, 1, 1) * y + beta.reshape(1, -1, 1, 1)
    return jnp.maximum(y, 0.0)


if __name__ == "__main__":
    # Small shapes consistent with ConvBlock(in_channels=4, out_channels=8).
    N, Cin, H, W = 2, 4, 16, 16
    Cout, KH, KW = 8, 3, 3

    key = jax.random.PRNGKey(0)
    kx, kw, kb = jax.random.split(key, 3)

    x = jax.random.normal(kx, (N, Cin, H, W), dtype=jnp.float32)

    # Deterministic param init (PyTorch-style uniform bounds for conv).
    fan_in = Cin * KH * KW
    bound = 1.0 / jnp.sqrt(jnp.float32(fan_in))
    conv_w = jax.random.uniform(kw, (Cout, Cin, KH, KW), jnp.float32, -bound, bound)
    conv_b = jax.random.uniform(kb, (Cout,), jnp.float32, -bound, bound)

    # BatchNorm2d defaults at __init__ (inference-mode running stats).
    gamma = jnp.ones((Cout,), jnp.float32)
    beta = jnp.zeros((Cout,), jnp.float32)
    running_mean = jnp.zeros((Cout,), jnp.float32)
    running_var = jnp.ones((Cout,), jnp.float32)

    out = conv_block_forward(x, conv_w, conv_b, gamma, beta,
                             running_mean, running_var)
    out = jax.block_until_ready(out)

    ref = reference_forward(x, conv_w, conv_b, gamma, beta,
                            running_mean, running_var)
    assert out.shape == (N, Cout, H, W)
    assert jnp.allclose(out, ref, atol=1e-4, rtol=1e-4), (
        float(jnp.max(jnp.abs(out - ref))))

    print("KERNEL_OK")
</pallas_src>

<mosaic_0001>
module attributes {stable_mosaic.version = 11 : i64} {
  func.func @conv_bn_relu_kernel(%arg0: i32, %arg1: memref<8x36xf32, #tpu.memory_space<vmem>>, %arg2: memref<36x256xf32, #tpu.memory_space<vmem>>, %arg3: memref<8x1xf32, #tpu.memory_space<vmem>>, %arg4: memref<8x256xf32, #tpu.memory_space<vmem>>) attributes {dimension_semantics = [#tpu.dimension_semantics<parallel>], iteration_bounds = array<i64: 2>, scalar_prefetch = 0 : i64, scratch_operands = 0 : i64, tpu.core_type = #tpu.core_type<tc>, window_params = [{pipeline_mode = #tpu.pipeline_mode<synchronous>, transform_indices = @transform_0, window_bounds = array<i64: 8, 36>}, {transform_indices = @transform_1, window_bounds = array<i64: 36, 256>}, {pipeline_mode = #tpu.pipeline_mode<synchronous>, transform_indices = @transform_2, window_bounds = array<i64: 8, 1>}, {transform_indices = @transform_3, window_bounds = array<i64: 8, 256>}]} {
    %c0 = arith.constant 0 : index
    %c0_0 = arith.constant 0 : index
    %0 = vector.load %arg1[%c0, %c0_0] : memref<8x36xf32, #tpu.memory_space<vmem>>, vector<8x36xf32>
    %c0_1 = arith.constant 0 : index
    %c0_2 = arith.constant 0 : index
    %1 = vector.load %arg2[%c0_1, %c0_2] : memref<36x256xf32, #tpu.memory_space<vmem>>, vector<36x256xf32>
    %cst = arith.constant dense<0.000000e+00> : vector<8x256xf32>
    %2 = tpu.matmul %0, %1, %cst {dimension_numbers = #tpu.dot_dimension_numbers<[1], [0], [0], [1], [0, 0, 1, 1], [], []>} : vector<8x36xf32>, vector<36x256xf32>, vector<8x256xf32> -> vector<8x256xf32>
    %c0_3 = arith.constant 0 : index
    %c0_4 = arith.constant 0 : index
    %3 = vector.load %arg3[%c0_3, %c0_4] : memref<8x1xf32, #tpu.memory_space<vmem>>, vector<8x1xf32>
    %4 = vector.broadcast %3 : vector<8x1xf32> to vector<8x256xf32>
    %5 = arith.addf %2, %4 : vector<8x256xf32>
    %cst_5 = arith.constant 0.000000e+00 : f32
    %6 = vector.broadcast %cst_5 : f32 to vector<8x256xf32>
    %7 = arith.maximumf %5, %6 : vector<8x256xf32>
    %c0_6 = arith.constant 0 : index
    %c0_7 = arith.constant 0 : index
    %8 = vector.load %arg4[%c0_6, %c0_7] : memref<8x256xf32, #tpu.memory_space<vmem>>, vector<8x256xf32>
    tpu.vector_store %arg4[%c0_6, %c0_7], %7 {strides = array<i32>} : memref<8x256xf32, #tpu.memory_space<vmem>>, vector<8x256xf32>,
    return
  }
  func.func @transform_0(%arg0: i32) -> (i32, i32) {
    %c0_i32 = arith.constant 0 : i32
    %c0_i32_0 = arith.constant 0 : i32
    %c0_i32_1 = arith.constant 0 : i32
    return %c0_i32, %c0_i32_0 : i32, i32
  }
  func.func @transform_1(%arg0: i32) -> (i32, i32) {
    %c0_i32 = arith.constant 0 : i32
    %c0_i32_0 = arith.constant 0 : i32
    return %c0_i32, %arg0 : i32, i32
  }
  func.func @transform_2(%arg0: i32) -> (i32, i32) {
    %c0_i32 = arith.constant 0 : i32
    %c0_i32_0 = arith.constant 0 : i32
    %c0_i32_1 = arith.constant 0 : i32
    return %c0_i32, %c0_i32_0 : i32, i32
  }
  func.func @transform_3(%arg0: i32) -> (i32, i32) {
    %c0_i32 = arith.constant 0 : i32
    %c0_i32_0 = arith.constant 0 : i32
    return %c0_i32, %arg0 : i32, i32
  }
}

</mosaic_0001>

<llo_original>
// kernel: tpu_custom_call.1
$region0: #{tpu_custom_call.1}
  #allocation0 [shape = 'u32[]', space=smem, size = 0x4, offset = 0x4, fixed_abs, tag = 'smem constant byte address 0x4 - core index']
  #allocation1 [shape = 'u32[144,128]{1,0:T(1,128)}', space=vmem, size = 0x12000, scoped, tag = 'internal scratch']
  %s0 = inlined_call_operand.vmem [shape: f32[8,36], index: 0, kind: input, shape index: {}]
  %s1 = inlined_call_operand.hbm [shape: f32[36,512], index: 1, kind: input, shape index: {}]
  %s2 = inlined_call_operand.vmem [shape: f32[8,1], index: 2, kind: input, shape index: {}]
  %s3 = inlined_call_operand.hbm [shape: f32[8,512], index: 3, kind: output, shape index: {}]
  %s4 = sld [smem:[#allocation0]]
  $region49: #{tpu_custom_call.1} parent=0
    _
  %s6 = ssub.s32 1, %s4
  %s7 = scalar_select 0, %s6, %s4
  $region1: #{tpu_custom_call.1} parent=0
    #allocation2 [shape = 'u8[81920]{0}', space=vmem, size = 0x14000, scoped, tag = 'input window, operand 1']
    #allocation3 [shape = 's32[2]{0}', space=sflag, size = 0x8, scoped, tag = 'scoped memory for tpu_custom_call.1']
    #allocation4 [shape = 's32[2]{0}', space=sflag, size = 0x8, scoped, tag = 'scoped memory for tpu_custom_call.1']
    #allocation5 [shape = 'u8[16384]{0}', space=vmem, size = 0x4000, scoped, tag = 'output window, operand 0']
    %8 = vsyncpa [#allocation3], 0
    %s9 = scalar_lea.sflag [#allocation3], 1
    %10 = vsyncpa %s9, 0
    %11 = vsyncpa [#allocation4], 0
    %s12 = scalar_lea.sflag [#allocation4], 1
    %13 = vsyncpa %s12, 0
    loop: start=0, step=1, limit=4
    $region2: #{tpu_custom_call.1} parent=1 // loop_pre_header
      _
    $region3: #{tpu_custom_call.1} parent=1 // loop_header
      %s15 = sphi 0, %s19
      %p16 = scmp.ge.s32.totalorder %s15, 4
      %s23 = sphi 0, %s23
      %s25 = sphi 0, %s23
      %s26 = sphi 0, %s25
      %s40 = sphi 0, %s26
      %s46 = sphi 0, %s48
      %s49 = sphi 0, %s46
      %s50 = sphi 0, %s49
      %s66 = sphi 0, %s50
      %s70 = sphi 0, %s70
      %s72 = sphi 0, %s70
      %s73 = sphi 0, %s72
      %s87 = sphi 0, %s73
      %s93 = sphi 0, %s95
      %s96 = sphi 0, %s93
      %s97 = sphi 0, %s96
      %s113 = sphi 0, %s97
    $region4: #{tpu_custom_call.1} parent=1 // loop_header_branch
      %18 = sbr.rel (%p16) target = $region8
    $region5: #{tpu_custom_call.1} parent=1 // loop_body
      %s20 = ssub.s32 %s15, 1
      %s21 = ssub.s32 %s15, 2
      %s22 = sadd.s32 %s15, 1
      %s24 = sadd.s32 %s23, 1
      %p27 = scmp.eq.s32.totalorder %s15, 1
      %p28 = scmp.ne.s32.totalorder %s23, %s25
      %p29 = scmp.eq.s32.totalorder %s15, 0
      %p30 = por %p28, %p29
      %p31 = scmp.ne.s32.totalorder %s23, %s25
      %p32 = scmp.eq.s32.totalorder %s20, 1
      %p33 = por %p31, %p32
      %p34 = scmp.ne.s32.totalorder %s25, %s26
      %p35 = scmp.eq.s32.totalorder %s20, 0
      %p36 = por %p34, %p35
      %p37 = scmp.ne.s32.totalorder %s25, %s26
      %p38 = scmp.eq.s32.totalorder %s21, 1
      %p39 = por %p37, %p38
      %p41 = scmp.ne.s32.totalorder %s26, %s40
      %p42 = scmp.eq.s32.totalorder %s21, 0
      %p43 = por %p41, %p42
      %s44 = ssub.s32 %s15, %s22
      %p45 = scmp.eq.s32.totalorder %s44, 0
      %s47 = sadd.s32 %s46, 1
      %s48 = scalar_select %p45, %s46, %s47
      %p51 = pneg %p45
      %p52 = scmp.eq.s32.totalorder %s15, 1
      %p53 = por %p51, %p52
      %p54 = scmp.ne.s32.totalorder %s46, %s49
      %p55 = scmp.eq.s32.totalorder %s15, 0
      %p56 = por %p54, %p55
      %p57 = scmp.ne.s32.totalorder %s46, %s49
      %p58 = scmp.eq.s32.totalorder %s20, 1
      %p59 = por %p57, %p58
      %p60 = scmp.ne.s32.totalorder %s49, %s50
      %p61 = scmp.eq.s32.totalorder %s20, 0
      %p62 = por %p60, %p61
      %p63 = scmp.ne.s32.totalorder %s49, %s50
      %p64 = scmp.eq.s32.totalorder %s21, 1
      %p65 = por %p63, %p64
      %p67 = scmp.ne.s32.totalorder %s50, %s66
      %p68 = scmp.eq.s32.totalorder %s21, 0
      %p69 = por %p67, %p68
      %s71 = sadd.s32 %s70, 1
      %p74 = scmp.eq.s32.totalorder %s15, 1
      %p75 = scmp.ne.s32.totalorder %s70, %s72
      %p76 = scmp.eq.s32.totalorder %s15, 0
      %p77 = por %p75, %p76
      %p78 = scmp.ne.s32.totalorder %s70, %s72
      %p79 = scmp.eq.s32.totalorder %s20, 1
      %p80 = por %p78, %p79
      %p81 = scmp.ne.s32.totalorder %s72, %s73
      %p82 = scmp.eq.s32.totalorder %s20, 0
      %p83 = por %p81, %p82
      %p84 = scmp.ne.s32.totalorder %s72, %s73
      %p85 = scmp.eq.s32.totalorder %s21, 1
      %p86 = por %p84, %p85
      %p88 = scmp.ne.s32.totalorder %s73, %s87
      %p89 = scmp.eq.s32.totalorder %s21, 0
      %p90 = por %p88, %p89
      %s91 = ssub.s32 %s15, %s22
      %p92 = scmp.eq.s32.totalorder %s91, 0
      %s94 = sadd.s32 %s93, 1
      %s95 = scalar_select %p92, %s93, %s94
      %p98 = pneg %p92
      %p99 = scmp.eq.s32.totalorder %s15, 1
      %p100 = por %p98, %p99
      %p101 = scmp.ne.s32.totalorder %s93, %s96
      %p102 = scmp.eq.s32.totalorder %s15, 0
      %p103 = por %p101, %p102
      %p104 = scmp.ne.s32.totalorder %s93, %s96
      %p105 = scmp.eq.s32.totalorder %s20, 1
      %p106 = por %p104, %p105
      %p107 = scmp.ne.s32.totalorder %s96, %s97
      %p108 = scmp.eq.s32.totalorder %s20, 0
      %p109 = por %p107, %p108
      %p110 = scmp.ne.s32.totalorder %s96, %s97
      %p111 = scmp.eq.s32.totalorder %s21, 1
      %p112 = por %p110, %p111
      %p114 = scmp.ne.s32.totalorder %s97, %s113
      %p115 = scmp.eq.s32.totalorder %s21, 0
      %p116 = por %p114, %p115
      %p117 = scmp.le.s32.totalorder 1, %s15
      %p118 = scmp.lt.s32.totalorder %s15, 3
      %p119 = pnand %p117, %p118
      %p120 = pneg %p119
      // Predicated region
      $region9: #{tpu_custom_call.1} parent=5 // pred_check
        _
      $region10: #{tpu_custom_call.1} parent=5 // pred_check_branch
        %122 = sbr.rel (%p119) target = $region12
      $region11: #{tpu_custom_call.1} parent=5 // pred_region
        %s123 = ssub.s32 %s15, 1
        // Predicated region
        $region13: #{tpu_custom_call.1} parent=11 // pred_check
          %p124 = pneg %p36
        $region14: #{tpu_custom_call.1} parent=11 // pred_check_branch
          %126 = sbr.rel (%p124) target = $region16
        $region15: #{tpu_custom_call.1} parent=11 // pred_region
          _
        $region16: #{tpu_custom_call.1} parent=11 // pred_fallthru
          _
        // Predicated region
        $region17: #{tpu_custom_call.1} parent=11 // pred_check
          %p127 = pneg %p83
        $region18: #{tpu_custom_call.1} parent=11 // pred_check_branch
          %129 = sbr.rel (%p127) target = $region20
        $region19: #{tpu_custom_call.1} parent=11 // pred_region
          _
        $region20: #{tpu_custom_call.1} parent=11 // pred_fallthru
          _
      $region12: #{tpu_custom_call.1} parent=5 // pred_fallthru
        _
      %p130 = scmp.lt.s32.totalorder %s15, 2
      // Predicated region
      $region21: #{tpu_custom_call.1} parent=5 // pred_check
        %p131 = pneg %p130
      $region22: #{tpu_custom_call.1} parent=5 // pred_check_branch
        %133 = sbr.rel (%p131) target = $region24
      $region23: #{tpu_custom_call.1} parent=5 // pred_region
        // Predicated region
        $region25: #{tpu_custom_call.1} parent=23 // pred_check
          %p134 = pneg %p56
        $region26: #{tpu_custom_call.1} parent=23 // pred_check_branch
          %136 = sbr.rel (%p134) target = $region28
        $region27: #{tpu_custom_call.1} parent=23 // pred_region
          %s137 = sand.u32 %s46, 1
          %s138 = scalar_lea.sflag [#allocation3], %s137
          %s139 = sand.u32 %s46, 1
          %s140 = smul.addr %s139, 80
          %s141 = scalar_lea.vmem [#allocation2], %s140
          %s142 = smul.u32 2, %s15
          %s144 = ssub.s32 1280, 1280
          %145 = vsyncadd %s138, %s144
          %s146 = smul.addr %s142, 128
          %s147 = scalar_lea.hbm %s1, %s146
          %s148 = sshll.u32 %s141, 4
          %s149 = int_to_ptr.vmem [resolvable:$true] %s148
          %154 = dma.hbm_to_vmem [thread:$0]  %s147, 1280, %s149, %s138, 512, 256, 16
        $region28: #{tpu_custom_call.1} parent=23 // pred_fallthru
          _
      $region24: #{tpu_custom_call.1} parent=5 // pred_fallthru
        _
      %p155 = scmp.le.s32.totalorder 1, %s15
      %p156 = scmp.lt.s32.totalorder %s15, 3
      %p157 = pnand %p155, %p156
      %p158 = pneg %p157
      // Predicated region
      $region29: #{tpu_custom_call.1} parent=5 // pred_check
        _
      $region30: #{tpu_custom_call.1} parent=5 // pred_check_branch
        %160 = sbr.rel (%p157) target = $region32
      $region31: #{tpu_custom_call.1} parent=5 // pred_region
        %s161 = ssub.s32 %s15, 1
        %s162 = sand.u32 %s49, 1
        %s163 = scalar_lea.sflag [#allocation3], %s162
        %s164 = sand.u32 %s49, 1
        %s165 = smul.addr %s164, 80
        %s166 = scalar_lea.vmem [#allocation2], %s165
        // Predicated region
        $region33: #{tpu_custom_call.1} parent=31 // pred_check
          %p167 = pneg %p62
        $region34: #{tpu_custom_call.1} parent=31 // pred_check_branch
          %169 = sbr.rel (%p167) target = $region36
        $region35: #{tpu_custom_call.1} parent=31 // pred_region
          %170 = dma.done %s163, 1280
        $region36: #{tpu_custom_call.1} parent=31 // pred_fallthru
          _
        %p171 = pneg %p36
        %p172 = pneg %p33
        %s173 = sand.u32 %s49, 1
        %s174 = scalar_lea.sflag [#allocation3], %s173
        %s175 = sand.u32 %s49, 1
        %s176 = smul.addr %s175, 80
        %s177 = scalar_lea.vmem [#allocation2], %s176
        %p178 = pneg %p62
        %p179 = pneg %p59
        %p180 = pneg %p83
        %p181 = pneg %p80
        %p182 = pneg %p109
        %p183 = pneg %p106
        %s184 = sand.u32 %s96, 1
        %s185 = scalar_lea.sflag [#allocation4], %s184
        %s186 = sand.u32 %s96, 1
        %s187 = smul.addr %s186, 16
        %s188 = scalar_lea.vmem [#allocation5], %s187
        %s189 = smul.u32 2, %s20
        %s190 = smul.u32 2, %s20
        %v191 = vld [vmem:[%s0] sm:$0xff]
        %v192 = vld [vmem:[%s166] sm:$0xff]
        %v193 = vld [vmem:[%s166 + $0x8] sm:$0xff]
        %v194 = vld [vmem:[%s166 + $0x10] sm:$0xff]
        %v195 = vld [vmem:[%s166 + $0x18] sm:$0xff]
        %v196 = vld [vmem:[%s166 + $0x20] sm:$0xff]
        %v197 = vld [vmem:[%s166 + $0x28] sm:$0xff]
        %v198 = vld [vmem:[%s166 + $0x30] sm:$0xff]
        %v199 = vld [vmem:[%s166 + $0x38] sm:$0xff]
        %v200 = vld [vmem:[%s166 + $0x40] sm:$0xf]
        %v201 = vld [vmem:[%s166 + $0x48] sm:$0xf]
        %v202 = vld [vmem:[%s2] sm:$0xff]
        %204 = vset.pattern.permute.xlu0 0
        %205 = vperm.xlu0 %204, %v202
        %v206 = vpop.permute.xlu0 %205
        %vm208 = vcmask 293888
        %v210 = vsel %vm208, %v191, 0
        %vm212 = vcmask 1043456
        %v214 = vsel %vm212, %v200, 0
        %v217 = vsel %vm212, %v201, 0
        %219 = vmatprep.subr.mxu0 %v193
        %220 = vmatpush1.msra.mxu0 %v192
        %221 = vmatprep.subr.mxu0 %v195
        %222 = vmatpush1.msra.mxu0 %v194
        %223 = vmatprep.subr.mxu0 %v197
        %224 = vmatpush1.msra.mxu0 %v196
        %225 = vmatprep.subr.mxu0 %v199
        %226 = vmatpush1.msra.mxu0 %v198
        %227 = vmatprep.subr.mxu0 %v217
        %228 = vmatpush1.msra.mxu0 %v214
        %229 = vmatprep.subr.mxu0 0.0
        %230 = vmatpush1.msra.mxu0 0.0
        %231 = vmatprep.subr.mxu0 0.0
        %232 = vmatpush1.msra.mxu0 0.0
        %233 = vmatprep.subr.mxu0 0.0
        %234 = vmatpush1.msra.mxu0 0.0
        %235 = vmatprep.subr.mxu0 0.0
        %236 = vmatpush1.msra.mxu0 0.0
        %237 = vmatprep.subr.mxu0 0.0
        %238 = vmatpush1.msra.mxu0 0.0
        %239 = vmatprep.subr.mxu0 0.0
        %240 = vmatpush1.msra.mxu0 0.0
        %241 = vmatprep.subr.mxu0 0.0
        %242 = vmatpush1.msra.mxu0 0.0
        %243 = vmatprep.subr.mxu0 0.0
        %244 = vmatpush1.msra.mxu0 0.0
        %245 = vmatprep.subr.mxu0 0.0
        %246 = vmatpush1.msra.mxu0 0.0
        %247 = vmatprep.subr.mxu0 0.0
        %248 = vmatpush1.msra.mxu0 0.0
        %249 = vmatprep.subr.mxu0 0.0
        %250 = vmatpush1.msra.mxu0 0.0
        %251 = vmatprep.subr.mxu0 0.0
        %252 = vmatpush1.msra.mxu0 0.0
        %253 = vmatprep.subr.mxu0 0.0
        %254 = vmatpush1.msra.mxu0 0.0
        %255 = vmatprep.subr.mxu0 0.0
        %256 = vmatpush1.msra.mxu0 0.0
        %257 = vmatprep.subr.mxu0 0.0
        %258 = vmatpush1.msra.mxu0 0.0
        %259 = vmatprep.subr.mxu0 0.0
        %260 = vmatpush1.msra.mxu0 0.0
        %261 = vmatprep.subr.mxu0 0.0
        %262 = vmatpush1.msra.mxu0 0.0
        %263 = vmatprep.subr.mxu0 0.0
        %264 = vmatpush1.msra.mxu0 0.0
        %265 = vmatprep.subr.mxu0 0.0
        %266 = vmatpush1.msra.mxu0 0.0
        %267 = vmatprep.subr.mxu0 0.0
        %268 = vmatpush1.msra.mxu0 0.0
        %269 = vmatprep.subr.mxu0 0.0
        %270 = vmatpush1.msra.mxu0 0.0
        %271 = vmatprep.subr.mxu0 0.0
        %272 = vmatpush1.msra.mxu0 0.0
        %273 = vmatprep.subr.mxu0 0.0
        %274 = vmatpush1.msra.mxu0 0.0
        %275 = vmatprep.subr.mxu0 0.0
        %276 = vmatpush1.msra.mxu0 0.0
        %277 = vmatprep.subr.mxu0 0.0
        %278 = vmatpush1.msra.mxu0 0.0
        %279 = vmatprep.subr.mxu0 0.0
        %280 = vmatpush1.msra.mxu0 0.0
        %281 = vmatprep.subr.mxu0 0.0
        %282 = vmatpush1.msra.mxu0 0.0
        %283 = vmatprep.mubr.f32.mxu0 0.0
        %284 = vmatmul.mubr.f32.gmra.mrb[0].mxu0 %v210
        %v285 = vpop.f32.mrb[0].mxu0
        %v286 = vadd.f32 %v206, %v285
        %v287 = vpop.f32.mrb[0].mxu0
        %v288 = vadd.f32 %v206, %v287
        %289 = vdwg.mxu0
        %v290 = vmax.f32 %v286, 0.0
        %v291 = vmax.f32 %v288, 0.0
        %292 = vst [vmem:[%s188] sm:$0xff] %v290
        %293 = vst [vmem:[%s188 + $0x8] sm:$0xff] %v291
        %s294 = sand.u32 %s96, 1
        %s295 = scalar_lea.sflag [#allocation4], %s294
        %s296 = sand.u32 %s96, 1
        %s297 = smul.addr %s296, 16
        %s298 = scalar_lea.vmem [#allocation5], %s297
        // Predicated region
        $region37: #{tpu_custom_call.1} parent=31 // pred_check
          %p299 = pneg %p106
        $region38: #{tpu_custom_call.1} parent=31 // pred_check_branch
          %301 = sbr.rel (%p299) target = $region40
        $region39: #{tpu_custom_call.1} parent=31 // pred_region
          %s302 = smul.u32 2, %s20
          %s304 = ssub.s32 256, 256
          %305 = vsyncadd %s295, %s304
          %s306 = smul.addr %s302, 128
          %s307 = scalar_lea.hbm %s3, %s306
          %s309 = sshll.u32 %s298, 4
          %s310 = int_to_ptr.vmem [resolvable:$true] %s309
          %312 = dma.vmem_to_hbm [thread:$0]  %s310, 256, %s307, %s295
        $region40: #{tpu_custom_call.1} parent=31 // pred_fallthru
          _
      $region32: #{tpu_custom_call.1} parent=5 // pred_fallthru
        _
      %p313 = scmp.le.s32.totalorder 2, %s15
      // Predicated region
      $region41: #{tpu_custom_call.1} parent=5 // pred_check
        %p314 = pneg %p313
      $region42: #{tpu_custom_call.1} parent=5 // pred_check_branch
        %316 = sbr.rel (%p314) target = $region44
      $region43: #{tpu_custom_call.1} parent=5 // pred_region
        %s317 = ssub.s32 %s15, 2
        // Predicated region
        $region45: #{tpu_custom_call.1} parent=43 // pred_check
          %p318 = pneg %p112
        $region46: #{tpu_custom_call.1} parent=43 // pred_check_branch
          %320 = sbr.rel (%p318) target = $region48
        $region47: #{tpu_custom_call.1} parent=43 // pred_region
          %s321 = sand.u32 %s97, 1
          %s322 = scalar_lea.sflag [#allocation4], %s321
          %s323 = sand.u32 %s97, 1
          %s324 = smul.addr %s323, 16
          %s325 = scalar_lea.vmem [#allocation5], %s324
          %326 = dma.done %s322, 256
        $region48: #{tpu_custom_call.1} parent=43 // pred_fallthru
          _
      $region44: #{tpu_custom_call.1} parent=5 // pred_fallthru
        _
    $region6: #{tpu_custom_call.1} parent=1 // loop_footer
      %s19 = sadd.s32 1, %s15
    $region7: #{tpu_custom_call.1} parent=1 // loop_footer_branch
      %14 = sbr.rel target = $region3
    $region8: #{tpu_custom_call.1} parent=1 // loop_exit
      _
    %327 = vsyncpa [#allocation3], 1
    %s328 = scalar_lea.sflag [#allocation3], 1
    %329 = vsyncpa %s328, 1
    %330 = vsyncpa [#allocation4], 1
    %s331 = scalar_lea.sflag [#allocation4], 1
    %332 = vsyncpa %s331, 1

</llo_original>
